<compile_context>
chip_gen: v7x
topology: tpu7x:2x2x1
jax: 0.10.0
libtpu: 0.0.40
codegen_flags: <defaults>
</compile_context>

<pallas_src>
import functools

import jax
import jax.numpy as jnp
from jax.experimental import pallas as pl
from jax.experimental.pallas import tpu as pltpu


def basic_block_kernel(x_ref, b1_ref, t1_ref, b2_ref, t2_ref, out_ref, *, H):
    # x_ref:   (N*H, W*C)    all batch elements, folded layout, f32
    # b*_ref:  (3, W*C, W*C) bf16 band-matrix row blocks (kh = 0,1,2),
    #                        BN scale pre-folded into the columns
    # t*_ref:  (1, W*C)      folded BN bias (tiled over W), f32
    x = x_ref[...]                                             # (NH, WC) f32
    NH = x.shape[0]

    # kh edge masks, hoisted and reused by both convs.  Batch is folded into
    # the M axis, so the per-image first/last-row tests use (row % H).
    row = jax.lax.broadcasted_iota(jnp.int32, x.shape, 0)
    not_first = (row % H) != 0           # shifted-up neighbour exists
    not_last = (row % H) != (H - 1)      # shifted-down neighbour exists

    def conv_bn(a, b_ref, t_ref):
        # rows shifted by +/-1 in H (kh taps); wrapped rows masked -> zero pad
        up = jnp.where(not_first, pltpu.roll(a, shift=1, axis=0), 0.0)
        dn = jnp.where(not_last, pltpu.roll(a, shift=NH - 1, axis=0), 0.0)
        # three accumulating MXU matmuls (no lane concatenate)
        acc = jnp.dot(up.astype(jnp.bfloat16), b_ref[0],
                      preferred_element_type=jnp.float32)
        acc += jnp.dot(a.astype(jnp.bfloat16), b_ref[1],
                       preferred_element_type=jnp.float32)
        acc += jnp.dot(dn.astype(jnp.bfloat16), b_ref[2],
                       preferred_element_type=jnp.float32)
        return acc + t_ref[...]                                # BN (scale folded)

    h1 = jnp.maximum(conv_bn(x, b1_ref, t1_ref), 0.0)          # conv1+BN1+ReLU
    h2 = conv_bn(h1, b2_ref, t2_ref)                           # conv2+BN2
    out_ref[...] = jnp.maximum(h2 + x, 0.0).astype(out_ref.dtype)


def _band_blocks(w, W, scale):
    """Fold the kw taps + channel contraction of a 3x3 HWIO conv weight (and
    the per-output-channel BN scale) into three (W*Cin, W*Cout) blocks, one
    per kh tap, acting on a W-folded row; zero padding along W is built into
    the band structure."""
    Cin, Cout = w.shape[2], w.shape[3]
    wi = jnp.arange(W)[:, None]
    wo = jnp.arange(W)[None, :]
    kw = wi - wo + 1                                     # (W, W)
    valid = (kw >= 0) & (kw <= 2)
    taps = w[:, jnp.clip(kw, 0, 2)]                      # (3, W, W, Cin, Cout)
    taps = jnp.where(valid[None, :, :, None, None], taps, 0.0)
    taps = taps * scale[None, None, None, None, :]       # fold BN scale (free)
    # (kh, wi, ci, wo, co) -> (3, W*Cin, W*Cout)
    return jnp.transpose(taps, (0, 1, 3, 2, 4)).reshape(3, W * Cin, W * Cout)


def basic_block(x, w1, bn1, w2, bn2, eps=1e-5):
    """x: (N,H,W,C) f32.  w*: (3,3,Cin,Cout) HWIO.  bn* = (gamma,beta,mean,var)."""
    N, H, W, Cin = x.shape
    Cout = w1.shape[3]
    assert Cin == Cout, "BasicBlock with downsample=None requires inplanes == planes"
    WC = W * Cout
    NH = N * H

    def fold(bn):
        g, b, m, v = bn
        s = (g / jnp.sqrt(v + eps)).astype(jnp.float32)
        t = (b - m * s).astype(jnp.float32)
        # bias tiled over W so it broadcasts over the folded (NH, W*C) layout
        return s, jnp.tile(t, W).reshape(1, WC)

    s1, t1 = fold(bn1)
    s2, t2 = fold(bn2)
    B1 = _band_blocks(w1, W, s1).astype(jnp.bfloat16)
    B2 = _band_blocks(w2, W, s2).astype(jnp.bfloat16)

    # fold N,H into the matmul M axis and W,C into the lane axis (both free,
    # contiguous reshapes)
    xf = x.reshape(NH, WC)

    out = pl.pallas_call(
        functools.partial(basic_block_kernel, H=H),
        out_shape=jax.ShapeDtypeStruct((NH, WC), x.dtype),
        grid_spec=pltpu.PrefetchScalarGridSpec(
            num_scalar_prefetch=0,
            grid=(1,),                 # single step: whole problem in one MXU pass
            in_specs=[
                pl.BlockSpec((NH, WC), lambda i: (0, 0)),
                pl.BlockSpec((3, WC, WC), lambda i: (0, 0, 0)),
                pl.BlockSpec((1, WC), lambda i: (0, 0)),
                pl.BlockSpec((3, WC, WC), lambda i: (0, 0, 0)),
                pl.BlockSpec((1, WC), lambda i: (0, 0)),
            ],
            out_specs=pl.BlockSpec((NH, WC), lambda i: (0, 0)),
        ),
        compiler_params=pltpu.CompilerParams(
            dimension_semantics=("arbitrary",)),
    )(xf, B1, t1, B2, t2)
    return out.reshape(N, H, W, Cout)


def reference(x, w1, bn1, w2, bn2, eps=1e-5):
    """Pure-JAX f32 reference (eval-mode BN), NHWC / HWIO."""
    dn = ("NHWC", "HWIO", "NHWC")

    def conv(a, w):
        return jax.lax.conv_general_dilated(
            a, w, window_strides=(1, 1), padding=((1, 1), (1, 1)),
            dimension_numbers=dn)

    def bn(a, p):
        g, b, m, v = p
        return (a - m) / jnp.sqrt(v + eps) * g + b

    out = jax.nn.relu(bn(conv(x, w1), bn1))
    out = bn(conv(out, w2), bn2)
    return jax.nn.relu(out + x)


if __name__ == "__main__":
    key = jax.random.PRNGKey(0)
    ks = jax.random.split(key, 11)

    # BasicBlock(inplanes=8, planes=8, stride=1, dilation=1, downsample=None)
    N, H, W, C = 2, 16, 16, 8

    x = jax.random.normal(ks[0], (N, H, W, C), jnp.float32)
    w1 = jax.random.normal(ks[1], (3, 3, C, C), jnp.float32) * 0.1
    w2 = jax.random.normal(ks[2], (3, 3, C, C), jnp.float32) * 0.1
    bn1 = (jax.random.uniform(ks[3], (C,), jnp.float32, 0.5, 1.5),   # gamma
           jax.random.normal(ks[4], (C,), jnp.float32) * 0.1,        # beta
           jax.random.normal(ks[5], (C,), jnp.float32) * 0.1,        # running_mean
           jax.random.uniform(ks[6], (C,), jnp.float32, 0.5, 1.5))   # running_var
    bn2 = (jax.random.uniform(ks[7], (C,), jnp.float32, 0.5, 1.5),
           jax.random.normal(ks[8], (C,), jnp.float32) * 0.1,
           jax.random.normal(ks[9], (C,), jnp.float32) * 0.1,
           jax.random.uniform(ks[10], (C,), jnp.float32, 0.5, 1.5))

    out = basic_block(x, w1, bn1, w2, bn2)
    jax.block_until_ready(out)

    ref = reference(x, w1, bn1, w2, bn2)
    err = float(jnp.max(jnp.abs(out - ref)))
    # bf16 MXU operands (with BN scale folded into the bf16 weights) and f32
    # accumulation: tolerance relaxed vs pure-f32.
    assert jnp.allclose(out, ref, atol=2e-2, rtol=2e-2), f"max abs err {err}"

    print("KERNEL_OK")
</pallas_src>

<mosaic_0001>
module attributes {stable_mosaic.version = 11 : i64} {
  func.func @basic_block_kernel(%arg0: i32, %arg1: memref<32x128xf32, #tpu.memory_space<vmem>>, %arg2: memref<3x128x128xbf16, #tpu.memory_space<vmem>>, %arg3: memref<1x128xf32, #tpu.memory_space<vmem>>, %arg4: memref<3x128x128xbf16, #tpu.memory_space<vmem>>, %arg5: memref<1x128xf32, #tpu.memory_space<vmem>>, %arg6: memref<32x128xf32, #tpu.memory_space<vmem>>) attributes {dimension_semantics = [#tpu.dimension_semantics<arbitrary>], iteration_bounds = array<i64: 1>, scalar_prefetch = 0 : i64, scratch_operands = 0 : i64, tpu.core_type = #tpu.core_type<tc>, window_params = [{pipeline_mode = #tpu.pipeline_mode<synchronous>, transform_indices = @transform_0, window_bounds = array<i64: 32, 128>}, {pipeline_mode = #tpu.pipeline_mode<synchronous>, transform_indices = @transform_1, window_bounds = array<i64: 3, 128, 128>}, {pipeline_mode = #tpu.pipeline_mode<synchronous>, transform_indices = @transform_2, window_bounds = array<i64: 1, 128>}, {pipeline_mode = #tpu.pipeline_mode<synchronous>, transform_indices = @transform_3, window_bounds = array<i64: 3, 128, 128>}, {pipeline_mode = #tpu.pipeline_mode<synchronous>, transform_indices = @transform_4, window_bounds = array<i64: 1, 128>}, {pipeline_mode = #tpu.pipeline_mode<synchronous>, transform_indices = @transform_5, window_bounds = array<i64: 32, 128>}]} {
    %c0 = arith.constant 0 : index
    %c0_0 = arith.constant 0 : index
    %0 = vector.load %arg1[%c0, %c0_0] : memref<32x128xf32, #tpu.memory_space<vmem>>, vector<32x128xf32>
    %1 = tpu.iota {dimensions = array<i32: 0>} : vector<32x128xi32>
    %c16_i32 = arith.constant 16 : i32
    %c0_i32 = arith.constant 0 : i32
    %2 = arith.cmpi eq, %c16_i32, %c0_i32 : i32
    %c1_i32 = arith.constant 1 : i32
    %3 = arith.select %2, %c1_i32, %c16_i32 : i32
    %4 = vector.broadcast %3 : i32 to vector<32x128xi32>
    %5 = arith.remsi %1, %4 : vector<32x128xi32>
    %c0_i32_1 = arith.constant 0 : i32
    %6 = vector.broadcast %c0_i32_1 : i32 to vector<32x128xi32>
    %7 = arith.cmpi ne, %5, %6 : vector<32x128xi32>
    %c0_i32_2 = arith.constant 0 : i32
    %8 = vector.broadcast %c0_i32_2 : i32 to vector<32x128xi32>
    %9 = arith.cmpi slt, %5, %8 : vector<32x128xi32>
    %c0_i32_3 = arith.constant 0 : i32
    %10 = arith.cmpi slt, %3, %c0_i32_3 : i32
    %11 = vector.broadcast %10 : i1 to vector<32x128xi1>
    %12 = vector.broadcast %11 : vector<32x128xi1> to vector<32x128xi1>
    %13 = arith.xori %9, %12 : vector<32x128xi1>
    %14 = arith.andi %13, %7 : vector<32x128xi1>
    %15 = vector.broadcast %3 : i32 to vector<32x128xi32>
    %16 = arith.addi %5, %15 : vector<32x128xi32>
    %17 = arith.select %14, %16, %5 : vector<32x128xi1>, vector<32x128xi32>
    %c0_i32_4 = arith.constant 0 : i32
    %18 = vector.broadcast %c0_i32_4 : i32 to vector<32x128xi32>
    %19 = arith.cmpi ne, %17, %18 : vector<32x128xi32>
    %c16_i32_5 = arith.constant 16 : i32
    %c0_i32_6 = arith.constant 0 : i32
    %20 = arith.cmpi eq, %c16_i32_5, %c0_i32_6 : i32
    %c1_i32_7 = arith.constant 1 : i32
    %21 = arith.select %20, %c1_i32_7, %c16_i32_5 : i32
    %22 = vector.broadcast %21 : i32 to vector<32x128xi32>
    %23 = arith.remsi %1, %22 : vector<32x128xi32>
    %c0_i32_8 = arith.constant 0 : i32
    %24 = vector.broadcast %c0_i32_8 : i32 to vector<32x128xi32>
    %25 = arith.cmpi ne, %23, %24 : vector<32x128xi32>
    %c0_i32_9 = arith.constant 0 : i32
    %26 = vector.broadcast %c0_i32_9 : i32 to vector<32x128xi32>
    %27 = arith.cmpi slt, %23, %26 : vector<32x128xi32>
    %c0_i32_10 = arith.constant 0 : i32
    %28 = arith.cmpi slt, %21, %c0_i32_10 : i32
    %29 = vector.broadcast %28 : i1 to vector<32x128xi1>
    %30 = vector.broadcast %29 : vector<32x128xi1> to vector<32x128xi1>
    %31 = arith.xori %27, %30 : vector<32x128xi1>
    %32 = arith.andi %31, %25 : vector<32x128xi1>
    %33 = vector.broadcast %21 : i32 to vector<32x128xi32>
    %34 = arith.addi %23, %33 : vector<32x128xi32>
    %35 = arith.select %32, %34, %23 : vector<32x128xi1>, vector<32x128xi32>
    %c15_i32 = arith.constant 15 : i32
    %36 = vector.broadcast %c15_i32 : i32 to vector<32x128xi32>
    %37 = arith.cmpi ne, %35, %36 : vector<32x128xi32>
    %c1_i32_11 = arith.constant 1 : i32
    %38 = tpu.dynamic_rotate %0 by %c1_i32_11 dim 0 : vector<32x128xf32>, i32 -> vector<32x128xf32>
    %cst = arith.constant 0.000000e+00 : f32
    %39 = vector.broadcast %cst : f32 to vector<32x128xf32>
    %40 = arith.select %19, %38, %39 : vector<32x128xi1>, vector<32x128xf32>
    %c31_i32 = arith.constant 31 : i32
    %41 = tpu.dynamic_rotate %0 by %c31_i32 dim 0 : vector<32x128xf32>, i32 -> vector<32x128xf32>
    %cst_12 = arith.constant 0.000000e+00 : f32
    %42 = vector.broadcast %cst_12 : f32 to vector<32x128xf32>
    %43 = arith.select %37, %41, %42 : vector<32x128xi1>, vector<32x128xf32>
    %44 = arith.truncf %40 : vector<32x128xf32> to vector<32x128xbf16>
    %c0_13 = arith.constant 0 : index
    %c0_14 = arith.constant 0 : index
    %c0_15 = arith.constant 0 : index
    %45 = vector.load %arg2[%c0_13, %c0_14, %c0_15] : memref<3x128x128xbf16, #tpu.memory_space<vmem>>, vector<1x128x128xbf16>
    %46 = vector.shape_cast %45 : vector<1x128x128xbf16> to vector<128x128xbf16>
    %cst_16 = arith.constant dense<0.000000e+00> : vector<32x128xf32>
    %47 = tpu.matmul %44, %46, %cst_16 {dimension_numbers = #tpu.dot_dimension_numbers<[1], [0], [0], [1], [0, 0, 1, 1], [], []>} : vector<32x128xbf16>, vector<128x128xbf16>, vector<32x128xf32> -> vector<32x128xf32>
    %48 = arith.truncf %0 : vector<32x128xf32> to vector<32x128xbf16>
    %c1 = arith.constant 1 : index
    %c0_17 = arith.constant 0 : index
    %c0_18 = arith.constant 0 : index
    %49 = vector.load %arg2[%c1, %c0_17, %c0_18] : memref<3x128x128xbf16, #tpu.memory_space<vmem>>, vector<1x128x128xbf16>
    %50 = vector.shape_cast %49 : vector<1x128x128xbf16> to vector<128x128xbf16>
    %cst_19 = arith.constant dense<0.000000e+00> : vector<32x128xf32>
    %51 = tpu.matmul %48, %50, %cst_19 {dimension_numbers = #tpu.dot_dimension_numbers<[1], [0], [0], [1], [0, 0, 1, 1], [], []>} : vector<32x128xbf16>, vector<128x128xbf16>, vector<32x128xf32> -> vector<32x128xf32>
    %52 = arith.addf %47, %51 : vector<32x128xf32>
    %53 = arith.truncf %43 : vector<32x128xf32> to vector<32x128xbf16>
    %c2 = arith.constant 2 : index
    %c0_20 = arith.constant 0 : index
    %c0_21 = arith.constant 0 : index
    %54 = vector.load %arg2[%c2, %c0_20, %c0_21] : memref<3x128x128xbf16, #tpu.memory_space<vmem>>, vector<1x128x128xbf16>
    %55 = vector.shape_cast %54 : vector<1x128x128xbf16> to vector<128x128xbf16>
    %cst_22 = arith.constant dense<0.000000e+00> : vector<32x128xf32>
    %56 = tpu.matmul %53, %55, %cst_22 {dimension_numbers = #tpu.dot_dimension_numbers<[1], [0], [0], [1], [0, 0, 1, 1], [], []>} : vector<32x128xbf16>, vector<128x128xbf16>, vector<32x128xf32> -> vector<32x128xf32>
    %57 = arith.addf %52, %56 : vector<32x128xf32>
    %c0_23 = arith.constant 0 : index
    %c0_24 = arith.constant 0 : index
    %58 = vector.load %arg3[%c0_23, %c0_24] : memref<1x128xf32, #tpu.memory_space<vmem>>, vector<1x128xf32>
    %59 = vector.broadcast %58 : vector<1x128xf32> to vector<32x128xf32>
    %60 = arith.addf %57, %59 : vector<32x128xf32>
    %cst_25 = arith.constant 0.000000e+00 : f32
    %61 = vector.broadcast %cst_25 : f32 to vector<32x128xf32>
    %62 = arith.maximumf %60, %61 : vector<32x128xf32>
    %c1_i32_26 = arith.constant 1 : i32
    %63 = tpu.dynamic_rotate %62 by %c1_i32_26 dim 0 : vector<32x128xf32>, i32 -> vector<32x128xf32>
    %cst_27 = arith.constant 0.000000e+00 : f32
    %64 = vector.broadcast %cst_27 : f32 to vector<32x128xf32>
    %65 = arith.select %19, %63, %64 : vector<32x128xi1>, vector<32x128xf32>
    %c31_i32_28 = arith.constant 31 : i32
    %66 = tpu.dynamic_rotate %62 by %c31_i32_28 dim 0 : vector<32x128xf32>, i32 -> vector<32x128xf32>
    %cst_29 = arith.constant 0.000000e+00 : f32
    %67 = vector.broadcast %cst_29 : f32 to vector<32x128xf32>
    %68 = arith.select %37, %66, %67 : vector<32x128xi1>, vector<32x128xf32>
    %69 = arith.truncf %65 : vector<32x128xf32> to vector<32x128xbf16>
    %c0_30 = arith.constant 0 : index
    %c0_31 = arith.constant 0 : index
    %c0_32 = arith.constant 0 : index
    %70 = vector.load %arg4[%c0_30, %c0_31, %c0_32] : memref<3x128x128xbf16, #tpu.memory_space<vmem>>, vector<1x128x128xbf16>
    %71 = vector.shape_cast %70 : vector<1x128x128xbf16> to vector<128x128xbf16>
    %cst_33 = arith.constant dense<0.000000e+00> : vector<32x128xf32>
    %72 = tpu.matmul %69, %71, %cst_33 {dimension_numbers = #tpu.dot_dimension_numbers<[1], [0], [0], [1], [0, 0, 1, 1], [], []>} : vector<32x128xbf16>, vector<128x128xbf16>, vector<32x128xf32> -> vector<32x128xf32>
    %73 = arith.truncf %62 : vector<32x128xf32> to vector<32x128xbf16>
    %c1_34 = arith.constant 1 : index
    %c0_35 = arith.constant 0 : index
    %c0_36 = arith.constant 0 : index
    %74 = vector.load %arg4[%c1_34, %c0_35, %c0_36] : memref<3x128x128xbf16, #tpu.memory_space<vmem>>, vector<1x128x128xbf16>
    %75 = vector.shape_cast %74 : vector<1x128x128xbf16> to vector<128x128xbf16>
    %cst_37 = arith.constant dense<0.000000e+00> : vector<32x128xf32>
    %76 = tpu.matmul %73, %75, %cst_37 {dimension_numbers = #tpu.dot_dimension_numbers<[1], [0], [0], [1], [0, 0, 1, 1], [], []>} : vector<32x128xbf16>, vector<128x128xbf16>, vector<32x128xf32> -> vector<32x128xf32>
    %77 = arith.addf %72, %76 : vector<32x128xf32>
    %78 = arith.truncf %68 : vector<32x128xf32> to vector<32x128xbf16>
    %c2_38 = arith.constant 2 : index
    %c0_39 = arith.constant 0 : index
    %c0_40 = arith.constant 0 : index
    %79 = vector.load %arg4[%c2_38, %c0_39, %c0_40] : memref<3x128x128xbf16, #tpu.memory_space<vmem>>, vector<1x128x128xbf16>
    %80 = vector.shape_cast %79 : vector<1x128x128xbf16> to vector<128x128xbf16>
    %cst_41 = arith.constant dense<0.000000e+00> : vector<32x128xf32>
    %81 = tpu.matmul %78, %80, %cst_41 {dimension_numbers = #tpu.dot_dimension_numbers<[1], [0], [0], [1], [0, 0, 1, 1], [], []>} : vector<32x128xbf16>, vector<128x128xbf16>, vector<32x128xf32> -> vector<32x128xf32>
    %82 = arith.addf %77, %81 : vector<32x128xf32>
    %c0_42 = arith.constant 0 : index
    %c0_43 = arith.constant 0 : index
    %83 = vector.load %arg5[%c0_42, %c0_43] : memref<1x128xf32, #tpu.memory_space<vmem>>, vector<1x128xf32>
    %84 = vector.broadcast %83 : vector<1x128xf32> to vector<32x128xf32>
    %85 = arith.addf %82, %84 : vector<32x128xf32>
    %86 = arith.addf %85, %0 : vector<32x128xf32>
    %cst_44 = arith.constant 0.000000e+00 : f32
    %87 = vector.broadcast %cst_44 : f32 to vector<32x128xf32>
    %88 = arith.maximumf %86, %87 : vector<32x128xf32>
    %c0_45 = arith.constant 0 : index
    %c0_46 = arith.constant 0 : index
    %89 = vector.load %arg6[%c0_45, %c0_46] : memref<32x128xf32, #tpu.memory_space<vmem>>, vector<32x128xf32>
    tpu.vector_store %arg6[%c0_45, %c0_46], %88 {strides = array<i32>} : memref<32x128xf32, #tpu.memory_space<vmem>>, vector<32x128xf32>,
    return
  }
  func.func @transform_0(%arg0: i32) -> (i32, i32) {
    %c0_i32 = arith.constant 0 : i32
    %c0_i32_0 = arith.constant 0 : i32
    %c0_i32_1 = arith.constant 0 : i32
    return %c0_i32, %c0_i32_0 : i32, i32
  }
  func.func @transform_1(%arg0: i32) -> (i32, i32, i32) {
    %c0_i32 = arith.constant 0 : i32
    %c0_i32_0 = arith.constant 0 : i32
    %c0_i32_1 = arith.constant 0 : i32
    %c0_i32_2 = arith.constant 0 : i32
    return %c0_i32, %c0_i32_0, %c0_i32_1 : i32, i32, i32
  }
  func.func @transform_2(%arg0: i32) -> (i32, i32) {
    %c0_i32 = arith.constant 0 : i32
    %c0_i32_0 = arith.constant 0 : i32
    %c0_i32_1 = arith.constant 0 : i32
    return %c0_i32, %c0_i32_0 : i32, i32
  }
  func.func @transform_3(%arg0: i32) -> (i32, i32, i32) {
    %c0_i32 = arith.constant 0 : i32
    %c0_i32_0 = arith.constant 0 : i32
    %c0_i32_1 = arith.constant 0 : i32
    %c0_i32_2 = arith.constant 0 : i32
    return %c0_i32, %c0_i32_0, %c0_i32_1 : i32, i32, i32
  }
  func.func @transform_4(%arg0: i32) -> (i32, i32) {
    %c0_i32 = arith.constant 0 : i32
    %c0_i32_0 = arith.constant 0 : i32
    %c0_i32_1 = arith.constant 0 : i32
    return %c0_i32, %c0_i32_0 : i32, i32
  }
  func.func @transform_5(%arg0: i32) -> (i32, i32) {
    %c0_i32 = arith.constant 0 : i32
    %c0_i32_0 = arith.constant 0 : i32
    %c0_i32_1 = arith.constant 0 : i32
    return %c0_i32, %c0_i32_0 : i32, i32
  }
}

</mosaic_0001>

<llo_original>
// kernel: tpu_custom_call.1
$region0: #{tpu_custom_call.1}
  #allocation0 [shape = 'u32[]', space=smem, size = 0x4, offset = 0x4, fixed_abs, tag = 'smem constant byte address 0x4 - core index']
  #allocation1 [shape = 'u32[144,128]{1,0:T(1,128)}', space=vmem, size = 0x12000, scoped, tag = 'internal scratch']
  %s0 = inlined_call_operand.hbm [shape: f32[32,128], index: 0, kind: input, shape index: {}]
  %s1 = inlined_call_operand.hbm [shape: bf16[3,128,128], index: 1, kind: input, shape index: {}]
  %s2 = inlined_call_operand.vmem [shape: f32[1,128], index: 2, kind: input, shape index: {}]
  %s3 = inlined_call_operand.hbm [shape: bf16[3,128,128], index: 3, kind: input, shape index: {}]
  %s4 = inlined_call_operand.vmem [shape: f32[1,128], index: 4, kind: input, shape index: {}]
  %s5 = inlined_call_operand.hbm [shape: f32[32,128], index: 5, kind: output, shape index: {}]
  %s6 = sld [smem:[#allocation0]]
  $region42: #{tpu_custom_call.1} parent=0
    _
  %s8 = ssub.s32 1, %s6
  %s9 = scalar_select 0, %s8, %s6
  $region1: #{tpu_custom_call.1} parent=0
    #allocation2 [shape = 'u8[16384]{0}', space=vmem, size = 0x4000, scoped, tag = 'input window, operand 0, single buffered']
    #allocation3 [shape = 's32[1]{0}', space=sflag, size = 0x4, scoped, tag = 'scoped memory for tpu_custom_call.1']
    #allocation4 [shape = 's32[1]{0}', space=sflag, size = 0x4, scoped, tag = 'scoped memory for tpu_custom_call.1']
    #allocation5 [shape = 'u8[98304]{0}', space=vmem, size = 0x18000, scoped, tag = 'input window, operand 1, single buffered']
    #allocation6 [shape = 's32[1]{0}', space=sflag, size = 0x4, scoped, tag = 'scoped memory for tpu_custom_call.1']
    #allocation7 [shape = 'u8[98304]{0}', space=vmem, size = 0x18000, scoped, tag = 'input window, operand 3, single buffered']
    #allocation8 [shape = 'u8[16384]{0}', space=vmem, size = 0x4000, scoped, tag = 'output window, operand 0, single buffered']
    %10 = vsyncpa [#allocation3], 0
    %11 = vsyncpa [#allocation6], 0
    %12 = vsyncpa [#allocation4], 0
    // Predicated region
    $region2: #{tpu_custom_call.1} parent=1 // pred_check
      _
    $region3: #{tpu_custom_call.1} parent=1 // pred_check_branch
      %14 = sbr.rel (0) target = $region5
    $region4: #{tpu_custom_call.1} parent=1 // pred_region
      %s16 = ssub.s32 512, 512
      %17 = vsyncadd [#allocation3], %s16
      %s18 = sshll.u32 [#allocation2], 4
      %s19 = int_to_ptr.vmem [resolvable:$true] %s18
      %24 = dma.hbm_to_vmem [thread:$0]  %s0, 512, %s19, [#allocation3], 128, 128, 8
    $region5: #{tpu_custom_call.1} parent=1 // pred_fallthru
      _
    // Predicated region
    $region6: #{tpu_custom_call.1} parent=1 // pred_check
      _
    $region7: #{tpu_custom_call.1} parent=1 // pred_check_branch
      %26 = sbr.rel (0) target = $region9
    $region8: #{tpu_custom_call.1} parent=1 // pred_region
      %s28 = ssub.s32 3072, 3072
      %29 = vsyncadd [#allocation6], %s28
      %s30 = sshll.u32 [#allocation5], 4
      %s31 = int_to_ptr.vmem [resolvable:$true] %s30
      %36 = dma.hbm_to_vmem [thread:$0]  %s1, 3072, %s31, [#allocation6], 64, 64, 4
    $region9: #{tpu_custom_call.1} parent=1 // pred_fallthru
      _
    // Predicated region
    $region10: #{tpu_custom_call.1} parent=1 // pred_check
      _
    $region11: #{tpu_custom_call.1} parent=1 // pred_check_branch
      %38 = sbr.rel (0) target = $region13
    $region12: #{tpu_custom_call.1} parent=1 // pred_region
      _
    $region13: #{tpu_custom_call.1} parent=1 // pred_fallthru
      _
    // Predicated region
    $region14: #{tpu_custom_call.1} parent=1 // pred_check
      _
    $region15: #{tpu_custom_call.1} parent=1 // pred_check_branch
      %40 = sbr.rel (0) target = $region17
    $region16: #{tpu_custom_call.1} parent=1 // pred_region
      %s42 = ssub.s32 3072, 3072
      %43 = vsyncadd [#allocation6], %s42
      %s44 = sshll.u32 [#allocation7], 4
      %s45 = int_to_ptr.vmem [resolvable:$true] %s44
      %50 = dma.hbm_to_vmem [thread:$0]  %s3, 3072, %s45, [#allocation6], 64, 64, 4
    $region17: #{tpu_custom_call.1} parent=1 // pred_fallthru
      _
    // Predicated region
    $region18: #{tpu_custom_call.1} parent=1 // pred_check
      _
    $region19: #{tpu_custom_call.1} parent=1 // pred_check_branch
      %52 = sbr.rel (0) target = $region21
    $region20: #{tpu_custom_call.1} parent=1 // pred_region
      _
    $region21: #{tpu_custom_call.1} parent=1 // pred_fallthru
      _
    // Predicated region
    $region22: #{tpu_custom_call.1} parent=1 // pred_check
      _
    $region23: #{tpu_custom_call.1} parent=1 // pred_check_branch
      %54 = sbr.rel (0) target = $region25
    $region24: #{tpu_custom_call.1} parent=1 // pred_region
      %55 = dma.done [#allocation3], 512
    $region25: #{tpu_custom_call.1} parent=1 // pred_fallthru
      _
    // Predicated region
    $region26: #{tpu_custom_call.1} parent=1 // pred_check
      _
    $region27: #{tpu_custom_call.1} parent=1 // pred_check_branch
      %57 = sbr.rel (0) target = $region29
    $region28: #{tpu_custom_call.1} parent=1 // pred_region
      %58 = dma.done [#allocation6], 3072
    $region29: #{tpu_custom_call.1} parent=1 // pred_fallthru
      _
    // Predicated region
    $region30: #{tpu_custom_call.1} parent=1 // pred_check
      _
    $region31: #{tpu_custom_call.1} parent=1 // pred_check_branch
      %60 = sbr.rel (0) target = $region33
    $region32: #{tpu_custom_call.1} parent=1 // pred_region
      %61 = dma.done [#allocation6], 3072
    $region33: #{tpu_custom_call.1} parent=1 // pred_fallthru
      _
    %v63 = vld [vmem:[#allocation2] sm:$0xff]
    %v64 = vld [vmem:[#allocation2 + $0x8] sm:$0xff]
    %v65 = vld [vmem:[#allocation2 + $0x10] sm:$0xff]
    %v66 = vld [vmem:[#allocation2 + $0x18] sm:$0xff]
    %v67 = vlaneseq
    %v68 = vshrl.u32 %v67, 7
    %v69 = vadd.s32 %v68, 8
    %v70 = vadd.s32 %v68, 16
    %v71 = vadd.s32 %v68, 24
    %vm72 = vcmp.lt.s32.totalorder %v68, 0
    %v73 = vsub.s32 0, %v68
    %v74 = vsel %vm72, %v73, %v68
    %v75 = vshrl.u32 %v74, 4
    %v76 = vand.u32 %v74, 15
    %v77 = vsub.s32 0, %v76
    %v78 = vsel %vm72, %v77, %v76
    %vm79 = vcmp.lt.s32.totalorder %v69, 0
    %v80 = vsub.s32 0, %v69
    %v81 = vsel %vm79, %v80, %v69
    %v82 = vshrl.u32 %v81, 4
    %v83 = vand.u32 %v81, 15
    %v84 = vsub.s32 0, %v83
    %v85 = vsel %vm79, %v84, %v83
    %vm86 = vcmp.lt.s32.totalorder %v70, 0
    %v87 = vsub.s32 0, %v70
    %v88 = vsel %vm86, %v87, %v70
    %v89 = vshrl.u32 %v88, 4
    %v90 = vand.u32 %v88, 15
    %v91 = vsub.s32 0, %v90
    %v92 = vsel %vm86, %v91, %v90
    %vm93 = vcmp.lt.s32.totalorder %v71, 0
    %v94 = vsub.s32 0, %v71
    %v95 = vsel %vm93, %v94, %v71
    %v96 = vshrl.u32 %v95, 4
    %v97 = vand.u32 %v95, 15
    %v98 = vsub.s32 0, %v97
    %v99 = vsel %vm93, %v98, %v97
    %vm100 = vcmp.ne.s32.totalorder %v78, 0
    %vm101 = vcmp.ne.s32.totalorder %v85, 0
    %vm102 = vcmp.ne.s32.totalorder %v92, 0
    %vm103 = vcmp.ne.s32.totalorder %v99, 0
    %vm104 = vcmp.lt.s32.totalorder %v78, 0
    %vm105 = vcmp.lt.s32.totalorder %v85, 0
    %vm106 = vcmp.lt.s32.totalorder %v92, 0
    %vm107 = vcmp.lt.s32.totalorder %v99, 0
    %vm108 = vmand %vm104, %vm100
    %vm109 = vmand %vm105, %vm101
    %vm110 = vmand %vm106, %vm102
    %vm111 = vmand %vm107, %vm103
    %v112 = vadd.s32 %v78, 16
    %v113 = vadd.s32 %v85, 16
    %v114 = vadd.s32 %v92, 16
    %v115 = vadd.s32 %v99, 16
    %v116 = vsel %vm108, %v112, %v78
    %v117 = vsel %vm109, %v113, %v85
    %v118 = vsel %vm110, %v114, %v92
    %v119 = vsel %vm111, %v115, %v99
    %vm120 = vcmp.ne.s32.totalorder %v116, 0
    %vm121 = vcmp.ne.s32.totalorder %v117, 0
    %vm122 = vcmp.ne.s32.totalorder %v118, 0
    %vm123 = vcmp.ne.s32.totalorder %v119, 0
    %vm124 = vcmp.ne.s32.totalorder %v116, 15
    %vm125 = vcmp.ne.s32.totalorder %v117, 15
    %vm126 = vcmp.ne.s32.totalorder %v118, 15
    %vm127 = vcmp.ne.s32.totalorder %v119, 15
    %v128 = vrot.slane %v63, 7
    %v129 = vrot.slane %v64, 7
    %v130 = vrot.slane %v65, 7
    %v131 = vrot.slane %v66, 7
    %vm132 = vcmp.lt.s32.totalorder %v68, 1
    %v133 = vsel %vm132, %v130, %v131
    %v134 = vsel %vm132, %v129, %v130
    %v135 = vsel %vm132, %v128, %v129
    %v136 = vsel %vm132, %v131, %v128
    %v137 = vsel %vm120, %v136, 0.0
    %v138 = vsel %vm121, %v135, 0.0
    %v139 = vsel %vm122, %v134, 0.0
    %v140 = vsel %vm123, %v133, 0.0
    %v141 = vrot.slane %v63, 1
    %v142 = vrot.slane %v64, 1
    %v143 = vrot.slane %v65, 1
    %v144 = vrot.slane %v66, 1
    %vm145 = vcmp.lt.s32.totalorder %v68, 7
    %v146 = vsel %vm145, %v143, %v144
    %v147 = vsel %vm145, %v142, %v143
    %v148 = vsel %vm145, %v141, %v142
    %v149 = vsel %vm145, %v144, %v141
    %v150 = vsel %vm124, %v148, 0.0
    %v151 = vsel %vm125, %v147, 0.0
    %v152 = vsel %vm126, %v146, 0.0
    %v153 = vsel %vm127, %v149, 0.0
    %v154 = vpack.c.bf16 %v138, %v137
    %v155 = vpack.c.bf16 %v140, %v139
    %v156 = vld [vmem:[#allocation5] sm:$0xf]
    %v157 = vld [vmem:[#allocation5 + $0x4] sm:$0xf]
    %v158 = vld [vmem:[#allocation5 + $0x8] sm:$0xf]
    %v159 = vld [vmem:[#allocation5 + $0xc] sm:$0xf]
    %v160 = vld [vmem:[#allocation5 + $0x10] sm:$0xf]
    %v161 = vld [vmem:[#allocation5 + $0x14] sm:$0xf]
    %v162 = vld [vmem:[#allocation5 + $0x18] sm:$0xf]
    %v163 = vld [vmem:[#allocation5 + $0x1c] sm:$0xf]
    %v164 = vld [vmem:[#allocation5 + $0x20] sm:$0xf]
    %v165 = vld [vmem:[#allocation5 + $0x24] sm:$0xf]
    %v166 = vld [vmem:[#allocation5 + $0x28] sm:$0xf]
    %v167 = vld [vmem:[#allocation5 + $0x2c] sm:$0xf]
    %v168 = vld [vmem:[#allocation5 + $0x30] sm:$0xf]
    %v169 = vld [vmem:[#allocation5 + $0x34] sm:$0xf]
    %v170 = vld [vmem:[#allocation5 + $0x38] sm:$0xf]
    %v171 = vld [vmem:[#allocation5 + $0x3c] sm:$0xf]
    %v172 = vpack.c.bf16 %v64, %v63
    %v173 = vpack.c.bf16 %v66, %v65
    %s174 = scalar_lea.vmem [#allocation5], 64
    %v175 = vld [vmem:[%s174] sm:$0xf]
    %v176 = vld [vmem:[%s174 + $0x4] sm:$0xf]
    %v177 = vld [vmem:[%s174 + $0x8] sm:$0xf]
    %v178 = vld [vmem:[%s174 + $0xc] sm:$0xf]
    %v179 = vld [vmem:[%s174 + $0x10] sm:$0xf]
    %v180 = vld [vmem:[%s174 + $0x14] sm:$0xf]
    %v181 = vld [vmem:[%s174 + $0x18] sm:$0xf]
    %v182 = vld [vmem:[%s174 + $0x1c] sm:$0xf]
    %v183 = vld [vmem:[%s174 + $0x20] sm:$0xf]
    %v184 = vld [vmem:[%s174 + $0x24] sm:$0xf]
    %v185 = vld [vmem:[%s174 + $0x28] sm:$0xf]
    %v186 = vld [vmem:[%s174 + $0x2c] sm:$0xf]
    %v187 = vld [vmem:[%s174 + $0x30] sm:$0xf]
    %v188 = vld [vmem:[%s174 + $0x34] sm:$0xf]
    %v189 = vld [vmem:[%s174 + $0x38] sm:$0xf]
    %v190 = vld [vmem:[%s174 + $0x3c] sm:$0xf]
    %v207 = vunpack.c.l.b16 %v175
    %v208 = vunpack.c.l.b16 %v176
    %v209 = vunpack.c.l.b16 %v177
    %v210 = vunpack.c.l.b16 %v178
    %v211 = vunpack.c.l.b16 %v179
    %v212 = vunpack.c.l.b16 %v180
    %v213 = vunpack.c.l.b16 %v181
    %v214 = vunpack.c.l.b16 %v182
    %v215 = vunpack.c.l.b16 %v183
    %v216 = vunpack.c.l.b16 %v184
    %v217 = vunpack.c.l.b16 %v185
    %v218 = vunpack.c.l.b16 %v186
    %v219 = vunpack.c.l.b16 %v187
    %v220 = vunpack.c.l.b16 %v188
    %v221 = vunpack.c.l.b16 %v189
    %v222 = vunpack.c.l.b16 %v190
    %v223 = vpack.c.b16 %v208, %v207
    %v224 = vpack.c.b16 %v210, %v209
    %v225 = vpack.c.b16 %v212, %v211
    %v226 = vpack.c.b16 %v214, %v213
    %v227 = vpack.c.b16 %v216, %v215
    %v228 = vpack.c.b16 %v218, %v217
    %v229 = vpack.c.b16 %v220, %v219
    %v230 = vpack.c.b16 %v222, %v221
    %239 = vmatprep.subr.bf16.mxu0 0
    %240 = vmatpush1.bf16.msra.mxu0 %v223
    %241 = vmatprep.subr.bf16.mxu0 0
    %242 = vmatpush1.bf16.msra.mxu0 %v224
    %243 = vmatprep.subr.bf16.mxu0 0
    %244 = vmatpush1.bf16.msra.mxu0 %v225
    %245 = vmatprep.subr.bf16.mxu0 0
    %246 = vmatpush1.bf16.msra.mxu0 %v226
    %247 = vmatprep.subr.bf16.mxu0 0
    %248 = vmatpush1.bf16.msra.mxu0 %v227
    %249 = vmatprep.subr.bf16.mxu0 0
    %250 = vmatpush1.bf16.msra.mxu0 %v228
    %251 = vmatprep.subr.bf16.mxu0 0
    %252 = vmatpush1.bf16.msra.mxu0 %v229
    %253 = vmatprep.subr.bf16.mxu0 0
    %254 = vmatpush1.bf16.msra.mxu0 %v230
    %255 = vmatprep.subr.bf16.mxu0 0
    %256 = vmatpush1.bf16.msra.mxu0 0
    %257 = vmatprep.subr.bf16.mxu0 0
    %258 = vmatpush1.bf16.msra.mxu0 0
    %259 = vmatprep.subr.bf16.mxu0 0
    %260 = vmatpush1.bf16.msra.mxu0 0
    %261 = vmatprep.subr.bf16.mxu0 0
    %262 = vmatpush1.bf16.msra.mxu0 0
    %263 = vmatprep.subr.bf16.mxu0 0
    %264 = vmatpush1.bf16.msra.mxu0 0
    %265 = vmatprep.subr.bf16.mxu0 0
    %266 = vmatpush1.bf16.msra.mxu0 0
    %267 = vmatprep.subr.bf16.mxu0 0
    %268 = vmatpush1.bf16.msra.mxu0 0
    %269 = vmatprep.subr.bf16.mxu0 0
    %270 = vmatpush1.bf16.msra.mxu0 0
    %271 = vmatprep.mubr.bf16.mxu0 0
    %272 = vmatmul.mubr.bf16.gmra.mrb[0].mxu0 %v172
    %v273 = vpop.f32.mrb[0].mxu0
    %v274 = vadd.f32 0.0, %v273
    %v275 = vpop.f32.mrb[0].mxu0
    %v276 = vpop.f32.mrb[0].mxu0
    %v277 = vadd.f32 0.0, %v276
    %v278 = vpop.f32.mrb[0].mxu0
    %279 = vmatprep.mubr.bf16.mxu0 0
    %280 = vmatmul.mubr.bf16.gmra.mrb[0].mxu0 %v173
    %v281 = vpop.f32.mrb[0].mxu0
    %v282 = vadd.f32 0.0, %v281
    %v283 = vpop.f32.mrb[0].mxu0
    %v284 = vpop.f32.mrb[0].mxu0
    %v285 = vadd.f32 0.0, %v284
    %v286 = vpop.f32.mrb[0].mxu0
    %287 = vdwg.mxu0
    %v304 = vunpack.c.l.b16 %v156
    %v305 = vunpack.c.l.b16 %v157
    %v306 = vunpack.c.l.b16 %v158
    %v307 = vunpack.c.l.b16 %v159
    %v308 = vunpack.c.l.b16 %v160
    %v309 = vunpack.c.l.b16 %v161
    %v310 = vunpack.c.l.b16 %v162
    %v311 = vunpack.c.l.b16 %v163
    %v312 = vunpack.c.l.b16 %v164
    %v313 = vunpack.c.l.b16 %v165
    %v314 = vunpack.c.l.b16 %v166
    %v315 = vunpack.c.l.b16 %v167
    %v316 = vunpack.c.l.b16 %v168
    %v317 = vunpack.c.l.b16 %v169
    %v318 = vunpack.c.l.b16 %v170
    %v319 = vunpack.c.l.b16 %v171
    %v320 = vpack.c.b16 %v305, %v304
    %v321 = vpack.c.b16 %v307, %v306
    %v322 = vpack.c.b16 %v309, %v308
    %v323 = vpack.c.b16 %v311, %v310
    %v324 = vpack.c.b16 %v313, %v312
    %v325 = vpack.c.b16 %v315, %v314
    %v326 = vpack.c.b16 %v317, %v316
    %v327 = vpack.c.b16 %v319, %v318
    %336 = vmatprep.subr.bf16.mxu0 0
    %337 = vmatpush1.bf16.msra.mxu0 %v320
    %338 = vmatprep.subr.bf16.mxu0 0
    %339 = vmatpush1.bf16.msra.mxu0 %v321
    %340 = vmatprep.subr.bf16.mxu0 0
    %341 = vmatpush1.bf16.msra.mxu0 %v322
    %342 = vmatprep.subr.bf16.mxu0 0
    %343 = vmatpush1.bf16.msra.mxu0 %v323
    %344 = vmatprep.subr.bf16.mxu0 0
    %345 = vmatpush1.bf16.msra.mxu0 %v324
    %346 = vmatprep.subr.bf16.mxu0 0
    %347 = vmatpush1.bf16.msra.mxu0 %v325
    %348 = vmatprep.subr.bf16.mxu0 0
    %349 = vmatpush1.bf16.msra.mxu0 %v326
    %350 = vmatprep.subr.bf16.mxu0 0
    %351 = vmatpush1.bf16.msra.mxu0 %v327
    %352 = vmatprep.subr.bf16.mxu0 0
    %353 = vmatpush1.bf16.msra.mxu0 0
    %354 = vmatprep.subr.bf16.mxu0 0
    %355 = vmatpush1.bf16.msra.mxu0 0
    %356 = vmatprep.subr.bf16.mxu0 0
    %357 = vmatpush1.bf16.msra.mxu0 0
    %358 = vmatprep.subr.bf16.mxu0 0
    %359 = vmatpush1.bf16.msra.mxu0 0
    %360 = vmatprep.subr.bf16.mxu0 0
    %361 = vmatpush1.bf16.msra.mxu0 0
    %362 = vmatprep.subr.bf16.mxu0 0
    %363 = vmatpush1.bf16.msra.mxu0 0
    %364 = vmatprep.subr.bf16.mxu0 0
    %365 = vmatpush1.bf16.msra.mxu0 0
    %366 = vmatprep.subr.bf16.mxu0 0
    %367 = vmatpush1.bf16.msra.mxu0 0
    %368 = vmatprep.mubr.bf16.mxu0 0
    %369 = vmatmul.mubr.bf16.gmra.mrb[0].mxu0 %v154
    %v370 = vpop.f32.mrb[0].mxu0
    %v371 = vadd.f32 %v274, %v370
    %v372 = vpop.f32.mrb[0].mxu0
    %v373 = vpop.f32.mrb[0].mxu0
    %v374 = vadd.f32 %v277, %v373
    %v375 = vpop.f32.mrb[0].mxu0
    %376 = vmatprep.mubr.bf16.mxu0 0
    %377 = vmatmul.mubr.bf16.gmra.mrb[0].mxu0 %v155
    %v378 = vpop.f32.mrb[0].mxu0
    %v379 = vadd.f32 %v282, %v378
    %v380 = vpop.f32.mrb[0].mxu0
    %v381 = vpop.f32.mrb[0].mxu0
    %v382 = vadd.f32 %v285, %v381
    %v383 = vpop.f32.mrb[0].mxu0
    %384 = vdwg.mxu0
    %v385 = vpack.c.bf16 %v151, %v150
    %v386 = vpack.c.bf16 %v153, %v152
    %s387 = scalar_lea.vmem [#allocation5], 128
    %v388 = vld [vmem:[%s387] sm:$0xf]
    %v389 = vld [vmem:[%s387 + $0x4] sm:$0xf]
    %v390 = vld [vmem:[%s387 + $0x8] sm:$0xf]
    %v391 = vld [vmem:[%s387 + $0xc] sm:$0xf]
    %v392 = vld [vmem:[%s387 + $0x10] sm:$0xf]
    %v393 = vld [vmem:[%s387 + $0x14] sm:$0xf]
    %v394 = vld [vmem:[%s387 + $0x18] sm:$0xf]
    %v395 = vld [vmem:[%s387 + $0x1c] sm:$0xf]
    %v396 = vld [vmem:[%s387 + $0x20] sm:$0xf]
    %v397 = vld [vmem:[%s387 + $0x24] sm:$0xf]
    %v398 = vld [vmem:[%s387 + $0x28] sm:$0xf]
    %v399 = vld [vmem:[%s387 + $0x2c] sm:$0xf]
    %v400 = vld [vmem:[%s387 + $0x30] sm:$0xf]
    %v401 = vld [vmem:[%s387 + $0x34] sm:$0xf]
    %v402 = vld [vmem:[%s387 + $0x38] sm:$0xf]
    %v403 = vld [vmem:[%s387 + $0x3c] sm:$0xf]
    %v420 = vunpack.c.l.b16 %v388
    %v421 = vunpack.c.l.b16 %v389
    %v422 = vunpack.c.l.b16 %v390
    %v423 = vunpack.c.l.b16 %v391
    %v424 = vunpack.c.l.b16 %v392
    %v425 = vunpack.c.l.b16 %v393
    %v426 = vunpack.c.l.b16 %v394
    %v427 = vunpack.c.l.b16 %v395
    %v428 = vunpack.c.l.b16 %v396
    %v429 = vunpack.c.l.b16 %v397
    %v430 = vunpack.c.l.b16 %v398
    %v431 = vunpack.c.l.b16 %v399
    %v432 = vunpack.c.l.b16 %v400
    %v433 = vunpack.c.l.b16 %v401
    %v434 = vunpack.c.l.b16 %v402
    %v435 = vunpack.c.l.b16 %v403
    %v436 = vpack.c.b16 %v421, %v420
    %v437 = vpack.c.b16 %v423, %v422
    %v438 = vpack.c.b16 %v425, %v424
    %v439 = vpack.c.b16 %v427, %v426
    %v440 = vpack.c.b16 %v429, %v428
    %v441 = vpack.c.b16 %v431, %v430
    %v442 = vpack.c.b16 %v433, %v432
    %v443 = vpack.c.b16 %v435, %v434
    %452 = vmatprep.subr.bf16.mxu0 0
    %453 = vmatpush1.bf16.msra.mxu0 %v436
    %454 = vmatprep.subr.bf16.mxu0 0
    %455 = vmatpush1.bf16.msra.mxu0 %v437
    %456 = vmatprep.subr.bf16.mxu0 0
    %457 = vmatpush1.bf16.msra.mxu0 %v438
    %458 = vmatprep.subr.bf16.mxu0 0
    %459 = vmatpush1.bf16.msra.mxu0 %v439
    %460 = vmatprep.subr.bf16.mxu0 0
    %461 = vmatpush1.bf16.msra.mxu0 %v440
    %462 = vmatprep.subr.bf16.mxu0 0
    %463 = vmatpush1.bf16.msra.mxu0 %v441
    %464 = vmatprep.subr.bf16.mxu0 0
    %465 = vmatpush1.bf16.msra.mxu0 %v442
    %466 = vmatprep.subr.bf16.mxu0 0
    %467 = vmatpush1.bf16.msra.mxu0 %v443
    %468 = vmatprep.subr.bf16.mxu0 0
    %469 = vmatpush1.bf16.msra.mxu0 0
    %470 = vmatprep.subr.bf16.mxu0 0
    %471 = vmatpush1.bf16.msra.mxu0 0
    %472 = vmatprep.subr.bf16.mxu0 0
    %473 = vmatpush1.bf16.msra.mxu0 0
    %474 = vmatprep.subr.bf16.mxu0 0
    %475 = vmatpush1.bf16.msra.mxu0 0
    %476 = vmatprep.subr.bf16.mxu0 0
    %477 = vmatpush1.bf16.msra.mxu0 0
    %478 = vmatprep.subr.bf16.mxu0 0
    %479 = vmatpush1.bf16.msra.mxu0 0
    %480 = vmatprep.subr.bf16.mxu0 0
    %481 = vmatpush1.bf16.msra.mxu0 0
    %482 = vmatprep.subr.bf16.mxu0 0
    %483 = vmatpush1.bf16.msra.mxu0 0
    %484 = vmatprep.mubr.bf16.mxu0 0
    %485 = vmatmul.mubr.bf16.gmra.mrb[0].mxu0 %v385
    %v486 = vpop.f32.mrb[0].mxu0
    %v487 = vadd.f32 0.0, %v486
    %v488 = vpop.f32.mrb[0].mxu0
    %v489 = vpop.f32.mrb[0].mxu0
    %v490 = vadd.f32 0.0, %v489
    %v491 = vpop.f32.mrb[0].mxu0
    %492 = vmatprep.mubr.bf16.mxu0 0
    %493 = vmatmul.mubr.bf16.gmra.mrb[0].mxu0 %v386
    %v494 = vpop.f32.mrb[0].mxu0
    %v495 = vadd.f32 0.0, %v494
    %v496 = vpop.f32.mrb[0].mxu0
    %v497 = vpop.f32.mrb[0].mxu0
    %v498 = vadd.f32 0.0, %v497
    %v499 = vpop.f32.mrb[0].mxu0
    %500 = vdwg.mxu0
    %v501 = vadd.f32 %v371, %v487
    %v502 = vadd.f32 %v374, %v490
    %v503 = vadd.f32 %v379, %v495
    %v504 = vadd.f32 %v382, %v498
    %v505 = vld [vmem:[%s2] sm:$0x1]
    %v507 = vlaneseq
    %v508 = vshrl.u32 %v507, 7
    %v509 = vsub.s32 0, %v508
    %v510 = vrot.slane %v505, %v509
    %v512 = vadd.f32 %v501, %v510
    %v513 = vadd.f32 %v502, %v510
    %v514 = vadd.f32 %v503, %v510
    %v515 = vadd.f32 %v504, %v510
    %v516 = vmax.f32 %v512, 0.0
    %v517 = vmax.f32 %v513, 0.0
    %v518 = vmax.f32 %v514, 0.0
    %v519 = vmax.f32 %v515, 0.0
    %v520 = vrot.slane %v516, 7
    %v521 = vrot.slane %v517, 7
    %v522 = vrot.slane %v518, 7
    %v523 = vrot.slane %v519, 7
    %v524 = vsel %vm132, %v522, %v523
    %v525 = vsel %vm132, %v521, %v522
    %v526 = vsel %vm132, %v520, %v521
    %v527 = vsel %vm132, %v523, %v520
    %v528 = vsel %vm120, %v527, 0.0
    %v529 = vsel %vm121, %v526, 0.0
    %v530 = vsel %vm122, %v525, 0.0
    %v531 = vsel %vm123, %v524, 0.0
    %v532 = vrot.slane %v516, 1
    %v533 = vrot.slane %v517, 1
    %v534 = vrot.slane %v518, 1
    %v535 = vrot.slane %v519, 1
    %v536 = vsel %vm145, %v534, %v535
    %v537 = vsel %vm145, %v533, %v534
    %v538 = vsel %vm145, %v532, %v533
    %v539 = vsel %vm145, %v535, %v532
    %v540 = vsel %vm124, %v538, 0.0
    %v541 = vsel %vm125, %v537, 0.0
    %v542 = vsel %vm126, %v536, 0.0
    %v543 = vsel %vm127, %v539, 0.0
    %v544 = vpack.c.bf16 %v529, %v528
    %v545 = vpack.c.bf16 %v531, %v530
    %v546 = vld [vmem:[#allocation7] sm:$0xf]
    %v547 = vld [vmem:[#allocation7 + $0x4] sm:$0xf]
    %v548 = vld [vmem:[#allocation7 + $0x8] sm:$0xf]
    %v549 = vld [vmem:[#allocation7 + $0xc] sm:$0xf]
    %v550 = vld [vmem:[#allocation7 + $0x10] sm:$0xf]
    %v551 = vld [vmem:[#allocation7 + $0x14] sm:$0xf]
    %v552 = vld [vmem:[#allocation7 + $0x18] sm:$0xf]
    %v553 = vld [vmem:[#allocation7 + $0x1c] sm:$0xf]
    %v554 = vld [vmem:[#allocation7 + $0x20] sm:$0xf]
    %v555 = vld [vmem:[#allocation7 + $0x24] sm:$0xf]
    %v556 = vld [vmem:[#allocation7 + $0x28] sm:$0xf]
    %v557 = vld [vmem:[#allocation7 + $0x2c] sm:$0xf]
    %v558 = vld [vmem:[#allocation7 + $0x30] sm:$0xf]
    %v559 = vld [vmem:[#allocation7 + $0x34] sm:$0xf]
    %v560 = vld [vmem:[#allocation7 + $0x38] sm:$0xf]
    %v561 = vld [vmem:[#allocation7 + $0x3c] sm:$0xf]
    %v562 = vpack.c.bf16 %v517, %v516
    %v563 = vpack.c.bf16 %v519, %v518
    %s564 = scalar_lea.vmem [#allocation7], 64
    %v565 = vld [vmem:[%s564] sm:$0xf]
    %v566 = vld [vmem:[%s564 + $0x4] sm:$0xf]
    %v567 = vld [vmem:[%s564 + $0x8] sm:$0xf]
    %v568 = vld [vmem:[%s564 + $0xc] sm:$0xf]
    %v569 = vld [vmem:[%s564 + $0x10] sm:$0xf]
    %v570 = vld [vmem:[%s564 + $0x14] sm:$0xf]
    %v571 = vld [vmem:[%s564 + $0x18] sm:$0xf]
    %v572 = vld [vmem:[%s564 + $0x1c] sm:$0xf]
    %v573 = vld [vmem:[%s564 + $0x20] sm:$0xf]
    %v574 = vld [vmem:[%s564 + $0x24] sm:$0xf]
    %v575 = vld [vmem:[%s564 + $0x28] sm:$0xf]
    %v576 = vld [vmem:[%s564 + $0x2c] sm:$0xf]
    %v577 = vld [vmem:[%s564 + $0x30] sm:$0xf]
    %v578 = vld [vmem:[%s564 + $0x34] sm:$0xf]
    %v579 = vld [vmem:[%s564 + $0x38] sm:$0xf]
    %v580 = vld [vmem:[%s564 + $0x3c] sm:$0xf]
    %v597 = vunpack.c.l.b16 %v565
    %v598 = vunpack.c.l.b16 %v566
    %v599 = vunpack.c.l.b16 %v567
    %v600 = vunpack.c.l.b16 %v568
    %v601 = vunpack.c.l.b16 %v569
    %v602 = vunpack.c.l.b16 %v570
    %v603 = vunpack.c.l.b16 %v571
    %v604 = vunpack.c.l.b16 %v572
    %v605 = vunpack.c.l.b16 %v573
    %v606 = vunpack.c.l.b16 %v574
    %v607 = vunpack.c.l.b16 %v575
    %v608 = vunpack.c.l.b16 %v576
    %v609 = vunpack.c.l.b16 %v577
    %v610 = vunpack.c.l.b16 %v578
    %v611 = vunpack.c.l.b16 %v579
    %v612 = vunpack.c.l.b16 %v580
    %v613 = vpack.c.b16 %v598, %v597
    %v614 = vpack.c.b16 %v600, %v599
    %v615 = vpack.c.b16 %v602, %v601
    %v616 = vpack.c.b16 %v604, %v603
    %v617 = vpack.c.b16 %v606, %v605
    %v618 = vpack.c.b16 %v608, %v607
    %v619 = vpack.c.b16 %v610, %v609
    %v620 = vpack.c.b16 %v612, %v611
    %629 = vmatprep.subr.bf16.mxu0 0
    %630 = vmatpush1.bf16.msra.mxu0 %v613
    %631 = vmatprep.subr.bf16.mxu0 0
    %632 = vmatpush1.bf16.msra.mxu0 %v614
    %633 = vmatprep.subr.bf16.mxu0 0
    %634 = vmatpush1.bf16.msra.mxu0 %v615
    %635 = vmatprep.subr.bf16.mxu0 0
    %636 = vmatpush1.bf16.msra.mxu0 %v616
    %637 = vmatprep.subr.bf16.mxu0 0
    %638 = vmatpush1.bf16.msra.mxu0 %v617
    %639 = vmatprep.subr.bf16.mxu0 0
    %640 = vmatpush1.bf16.msra.mxu0 %v618
    %641 = vmatprep.subr.bf16.mxu0 0
    %642 = vmatpush1.bf16.msra.mxu0 %v619
    %643 = vmatprep.subr.bf16.mxu0 0
    %644 = vmatpush1.bf16.msra.mxu0 %v620
    %645 = vmatprep.subr.bf16.mxu0 0
    %646 = vmatpush1.bf16.msra.mxu0 0
    %647 = vmatprep.subr.bf16.mxu0 0
    %648 = vmatpush1.bf16.msra.mxu0 0
    %649 = vmatprep.subr.bf16.mxu0 0
    %650 = vmatpush1.bf16.msra.mxu0 0
    %651 = vmatprep.subr.bf16.mxu0 0
    %652 = vmatpush1.bf16.msra.mxu0 0
    %653 = vmatprep.subr.bf16.mxu0 0
    %654 = vmatpush1.bf16.msra.mxu0 0
    %655 = vmatprep.subr.bf16.mxu0 0
    %656 = vmatpush1.bf16.msra.mxu0 0
    %657 = vmatprep.subr.bf16.mxu0 0
    %658 = vmatpush1.bf16.msra.mxu0 0
    %659 = vmatprep.subr.bf16.mxu0 0
    %660 = vmatpush1.bf16.msra.mxu0 0
    %661 = vmatprep.mubr.bf16.mxu0 0
    %662 = vmatmul.mubr.bf16.gmra.mrb[0].mxu0 %v562
    %v663 = vpop.f32.mrb[0].mxu0
    %v664 = vadd.f32 0.0, %v663
    %v665 = vpop.f32.mrb[0].mxu0
    %v666 = vpop.f32.mrb[0].mxu0
    %v667 = vadd.f32 0.0, %v666
    %v668 = vpop.f32.mrb[0].mxu0
    %669 = vmatprep.mubr.bf16.mxu0 0
    %670 = vmatmul.mubr.bf16.gmra.mrb[0].mxu0 %v563
    %v671 = vpop.f32.mrb[0].mxu0
    %v672 = vadd.f32 0.0, %v671
    %v673 = vpop.f32.mrb[0].mxu0
    %v674 = vpop.f32.mrb[0].mxu0
    %v675 = vadd.f32 0.0, %v674
    %v676 = vpop.f32.mrb[0].mxu0
    %677 = vdwg.mxu0
    %v694 = vunpack.c.l.b16 %v546
    %v695 = vunpack.c.l.b16 %v547
    %v696 = vunpack.c.l.b16 %v548
    %v697 = vunpack.c.l.b16 %v549
    %v698 = vunpack.c.l.b16 %v550
    %v699 = vunpack.c.l.b16 %v551
    %v700 = vunpack.c.l.b16 %v552
    %v701 = vunpack.c.l.b16 %v553
    %v702 = vunpack.c.l.b16 %v554
    %v703 = vunpack.c.l.b16 %v555
    %v704 = vunpack.c.l.b16 %v556
    %v705 = vunpack.c.l.b16 %v557
    %v706 = vunpack.c.l.b16 %v558
    %v707 = vunpack.c.l.b16 %v559
    %v708 = vunpack.c.l.b16 %v560
    %v709 = vunpack.c.l.b16 %v561
    %v710 = vpack.c.b16 %v695, %v694
    %v711 = vpack.c.b16 %v697, %v696
    %v712 = vpack.c.b16 %v699, %v698
    %v713 = vpack.c.b16 %v701, %v700
    %v714 = vpack.c.b16 %v703, %v702
    %v715 = vpack.c.b16 %v705, %v704
    %v716 = vpack.c.b16 %v707, %v706
    %v717 = vpack.c.b16 %v709, %v708
    %726 = vmatprep.subr.bf16.mxu0 0
    %727 = vmatpush1.bf16.msra.mxu0 %v710
    %728 = vmatprep.subr.bf16.mxu0 0
    %729 = vmatpush1.bf16.msra.mxu0 %v711
    %730 = vmatprep.subr.bf16.mxu0 0
    %731 = vmatpush1.bf16.msra.mxu0 %v712
    %732 = vmatprep.subr.bf16.mxu0 0
    %733 = vmatpush1.bf16.msra.mxu0 %v713
    %734 = vmatprep.subr.bf16.mxu0 0
    %735 = vmatpush1.bf16.msra.mxu0 %v714
    %736 = vmatprep.subr.bf16.mxu0 0
    %737 = vmatpush1.bf16.msra.mxu0 %v715
    %738 = vmatprep.subr.bf16.mxu0 0
    %739 = vmatpush1.bf16.msra.mxu0 %v716
    %740 = vmatprep.subr.bf16.mxu0 0
    %741 = vmatpush1.bf16.msra.mxu0 %v717
    %742 = vmatprep.subr.bf16.mxu0 0
    %743 = vmatpush1.bf16.msra.mxu0 0
    %744 = vmatprep.subr.bf16.mxu0 0
    %745 = vmatpush1.bf16.msra.mxu0 0
    %746 = vmatprep.subr.bf16.mxu0 0
    %747 = vmatpush1.bf16.msra.mxu0 0
    %748 = vmatprep.subr.bf16.mxu0 0
    %749 = vmatpush1.bf16.msra.mxu0 0
    %750 = vmatprep.subr.bf16.mxu0 0
    %751 = vmatpush1.bf16.msra.mxu0 0
    %752 = vmatprep.subr.bf16.mxu0 0
    %753 = vmatpush1.bf16.msra.mxu0 0
    %754 = vmatprep.subr.bf16.mxu0 0
    %755 = vmatpush1.bf16.msra.mxu0 0
    %756 = vmatprep.subr.bf16.mxu0 0
    %757 = vmatpush1.bf16.msra.mxu0 0
    %758 = vmatprep.mubr.bf16.mxu0 0
    %759 = vmatmul.mubr.bf16.gmra.mrb[0].mxu0 %v544
    %v760 = vpop.f32.mrb[0].mxu0
    %v761 = vadd.f32 %v664, %v760
    %v762 = vpop.f32.mrb[0].mxu0
    %v763 = vpop.f32.mrb[0].mxu0
    %v764 = vadd.f32 %v667, %v763
    %v765 = vpop.f32.mrb[0].mxu0
    %766 = vmatprep.mubr.bf16.mxu0 0
    %767 = vmatmul.mubr.bf16.gmra.mrb[0].mxu0 %v545
    %v768 = vpop.f32.mrb[0].mxu0
    %v769 = vadd.f32 %v672, %v768
    %v770 = vpop.f32.mrb[0].mxu0
    %v771 = vpop.f32.mrb[0].mxu0
    %v772 = vadd.f32 %v675, %v771
    %v773 = vpop.f32.mrb[0].mxu0
    %774 = vdwg.mxu0
    %v775 = vpack.c.bf16 %v541, %v540
    %v776 = vpack.c.bf16 %v543, %v542
    %s777 = scalar_lea.vmem [#allocation7], 128
    %v778 = vld [vmem:[%s777] sm:$0xf]
    %v779 = vld [vmem:[%s777 + $0x4] sm:$0xf]
    %v780 = vld [vmem:[%s777 + $0x8] sm:$0xf]
    %v781 = vld [vmem:[%s777 + $0xc] sm:$0xf]
    %v782 = vld [vmem:[%s777 + $0x10] sm:$0xf]
    %v783 = vld [vmem:[%s777 + $0x14] sm:$0xf]
    %v784 = vld [vmem:[%s777 + $0x18] sm:$0xf]
    %v785 = vld [vmem:[%s777 + $0x1c] sm:$0xf]
    %v786 = vld [vmem:[%s777 + $0x20] sm:$0xf]
    %v787 = vld [vmem:[%s777 + $0x24] sm:$0xf]
    %v788 = vld [vmem:[%s777 + $0x28] sm:$0xf]
    %v789 = vld [vmem:[%s777 + $0x2c] sm:$0xf]
    %v790 = vld [vmem:[%s777 + $0x30] sm:$0xf]
    %v791 = vld [vmem:[%s777 + $0x34] sm:$0xf]
    %v792 = vld [vmem:[%s777 + $0x38] sm:$0xf]
    %v793 = vld [vmem:[%s777 + $0x3c] sm:$0xf]
    %v810 = vunpack.c.l.b16 %v778
    %v811 = vunpack.c.l.b16 %v779
    %v812 = vunpack.c.l.b16 %v780
    %v813 = vunpack.c.l.b16 %v781
    %v814 = vunpack.c.l.b16 %v782
    %v815 = vunpack.c.l.b16 %v783
    %v816 = vunpack.c.l.b16 %v784
    %v817 = vunpack.c.l.b16 %v785
    %v818 = vunpack.c.l.b16 %v786
    %v819 = vunpack.c.l.b16 %v787
    %v820 = vunpack.c.l.b16 %v788
    %v821 = vunpack.c.l.b16 %v789
    %v822 = vunpack.c.l.b16 %v790
    %v823 = vunpack.c.l.b16 %v791
    %v824 = vunpack.c.l.b16 %v792
    %v825 = vunpack.c.l.b16 %v793
    %v826 = vpack.c.b16 %v811, %v810
    %v827 = vpack.c.b16 %v813, %v812
    %v828 = vpack.c.b16 %v815, %v814
    %v829 = vpack.c.b16 %v817, %v816
    %v830 = vpack.c.b16 %v819, %v818
    %v831 = vpack.c.b16 %v821, %v820
    %v832 = vpack.c.b16 %v823, %v822
    %v833 = vpack.c.b16 %v825, %v824
    %842 = vmatprep.subr.bf16.mxu0 0
    %843 = vmatpush1.bf16.msra.mxu0 %v826
    %844 = vmatprep.subr.bf16.mxu0 0
    %845 = vmatpush1.bf16.msra.mxu0 %v827
    %846 = vmatprep.subr.bf16.mxu0 0
    %847 = vmatpush1.bf16.msra.mxu0 %v828
    %848 = vmatprep.subr.bf16.mxu0 0
    %849 = vmatpush1.bf16.msra.mxu0 %v829
    %850 = vmatprep.subr.bf16.mxu0 0
    %851 = vmatpush1.bf16.msra.mxu0 %v830
    %852 = vmatprep.subr.bf16.mxu0 0
    %853 = vmatpush1.bf16.msra.mxu0 %v831
    %854 = vmatprep.subr.bf16.mxu0 0
    %855 = vmatpush1.bf16.msra.mxu0 %v832
    %856 = vmatprep.subr.bf16.mxu0 0
    %857 = vmatpush1.bf16.msra.mxu0 %v833
    %858 = vmatprep.subr.bf16.mxu0 0
    %859 = vmatpush1.bf16.msra.mxu0 0
    %860 = vmatprep.subr.bf16.mxu0 0
    %861 = vmatpush1.bf16.msra.mxu0 0
    %862 = vmatprep.subr.bf16.mxu0 0
    %863 = vmatpush1.bf16.msra.mxu0 0
    %864 = vmatprep.subr.bf16.mxu0 0
    %865 = vmatpush1.bf16.msra.mxu0 0
    %866 = vmatprep.subr.bf16.mxu0 0
    %867 = vmatpush1.bf16.msra.mxu0 0
    %868 = vmatprep.subr.bf16.mxu0 0
    %869 = vmatpush1.bf16.msra.mxu0 0
    %870 = vmatprep.subr.bf16.mxu0 0
    %871 = vmatpush1.bf16.msra.mxu0 0
    %872 = vmatprep.subr.bf16.mxu0 0
    %873 = vmatpush1.bf16.msra.mxu0 0
    %874 = vmatprep.mubr.bf16.mxu0 0
    %875 = vmatmul.mubr.bf16.gmra.mrb[0].mxu0 %v775
    %v876 = vpop.f32.mrb[0].mxu0
    %v877 = vadd.f32 0.0, %v876
    %v878 = vpop.f32.mrb[0].mxu0
    %v879 = vpop.f32.mrb[0].mxu0
    %v880 = vadd.f32 0.0, %v879
    %v881 = vpop.f32.mrb[0].mxu0
    %882 = vmatprep.mubr.bf16.mxu0 0
    %883 = vmatmul.mubr.bf16.gmra.mrb[0].mxu0 %v776
    %v884 = vpop.f32.mrb[0].mxu0
    %v885 = vadd.f32 0.0, %v884
    %v886 = vpop.f32.mrb[0].mxu0
    %v887 = vpop.f32.mrb[0].mxu0
    %v888 = vadd.f32 0.0, %v887
    %v889 = vpop.f32.mrb[0].mxu0
    %890 = vdwg.mxu0
    %v891 = vadd.f32 %v761, %v877
    %v892 = vadd.f32 %v764, %v880
    %v893 = vadd.f32 %v769, %v885
    %v894 = vadd.f32 %v772, %v888
    %v895 = vld [vmem:[%s4] sm:$0x1]
    %v897 = vlaneseq
    %v898 = vshrl.u32 %v897, 7
    %v899 = vsub.s32 0, %v898
    %v900 = vrot.slane %v895, %v899
    %v902 = vadd.f32 %v891, %v900
    %v903 = vadd.f32 %v892, %v900
    %v904 = vadd.f32 %v893, %v900
    %v905 = vadd.f32 %v894, %v900
    %v906 = vadd.f32 %v902, %v63
    %v907 = vadd.f32 %v903, %v64
    %v908 = vadd.f32 %v904, %v65
    %v909 = vadd.f32 %v905, %v66
    %v910 = vmax.f32 %v906, 0.0
    %v911 = vmax.f32 %v907, 0.0
    %v912 = vmax.f32 %v908, 0.0
    %v913 = vmax.f32 %v909, 0.0
    %914 = vst [vmem:[#allocation8] sm:$0xff] %v910
    %915 = vst [vmem:[#allocation8 + $0x8] sm:$0xff] %v911
    %916 = vst [vmem:[#allocation8 + $0x10] sm:$0xff] %v912
    %917 = vst [vmem:[#allocation8 + $0x18] sm:$0xff] %v913
    // Predicated region
    $region34: #{tpu_custom_call.1} parent=1 // pred_check
      _
    $region35: #{tpu_custom_call.1} parent=1 // pred_check_branch
      %919 = sbr.rel (0) target = $region37
    $region36: #{tpu_custom_call.1} parent=1 // pred_region
      %s921 = ssub.s32 512, 512
      %922 = vsyncadd [#allocation4], %s921
      %s923 = sshll.u32 [#allocation8], 4
      %s924 = int_to_ptr.vmem [resolvable:$true] %s923
      %929 = dma.vmem_to_hbm [thread:$0]  %s924, 512, %s5, [#allocation4], 128, 128, 8
    $region37: #{tpu_custom_call.1} parent=1 // pred_fallthru
      _
    // Predicated region
    $region38: #{tpu_custom_call.1} parent=1 // pred_check
      _
    $region39: #{tpu_custom_call.1} parent=1 // pred_check_branch
      %931 = sbr.rel (0) target = $region41
    $region40: #{tpu_custom_call.1} parent=1 // pred_region
      %932 = dma.done [#allocation4], 512
    $region41: #{tpu_custom_call.1} parent=1 // pred_fallthru
      _
    %933 = vsyncpa [#allocation3], 1
    %934 = vsyncpa [#allocation6], 1
    %935 = vsyncpa [#allocation4], 1

</llo_original>
